<compile_context>
chip_gen: v7x
topology: tpu7x:2x2x1
jax: 0.10.0
libtpu: 0.0.40
codegen_flags: <defaults>
</compile_context>

<pallas_src>
import jax
import jax.numpy as jnp
from jax.experimental import pallas as pl
from jax.experimental.pallas import tpu as pltpu


def _round_up(x, m):
    return ((x + m - 1) // m) * m


def _pick_row_tile(hw):
    """Largest multiple-of-8 divisor of hw, capped at the ~512-row sweet spot.

    The cap of hw // 2 keeps at least two grid steps so the pooling
    accumulator path is exercised even on tiny demo images; for real image
    sizes the cap is 512 (re-sweep per-generation VMEM budget, esp. v7x).
    """
    cap = min(512, max(8, hw // 2))
    for t in range(cap - cap % 8, 7, -8):
        if hw % t == 0:
            return t
    return hw


def cassva_forward(x_nchw, params):
    """Forward pass.  x_nchw: [B, C, H, W] float32 -> logits [B, n_class]."""
    conv_w, conv_b, fc_w, fc_b = params
    B, C, H, W = x_nchw.shape
    K = 9 * C
    F = conv_w.shape[-1]
    n_class = fc_w.shape[-1]
    HW = H * W

    K8 = _round_up(K, 8)            # sublane-friendly contraction dim, NOT 128
    F_pad = _round_up(F, 128)       # lane-dense feature dim (VMEM-only cost)
    NC_pad = _round_up(n_class, 128)  # lane-dense output slab

    # ---- layout glue: NCHW -> NHWC, im2col (3x3, stride 1, pad 1) ----
    x = jnp.transpose(x_nchw, (0, 2, 3, 1)).astype(jnp.float32)   # [B,H,W,C]
    xp = jnp.pad(x, ((0, 0), (1, 1), (1, 1), (0, 0)))
    taps = [xp[:, i:i + H, j:j + W, :] for i in range(3) for j in range(3)]
    patches = jnp.concatenate(taps, axis=-1).reshape(B, HW, K)    # [B,HW,9C]
    patches = jnp.pad(patches, ((0, 0), (0, 0), (0, K8 - K)))     # tiny 9C->K8

    # Zero-padded weights (padded rows/lanes contribute exactly 0).
    cw = jnp.pad(conv_w.astype(jnp.float32),
                 ((0, K8 - K), (0, F_pad - F)))                   # [K8,F_pad]
    cb = jnp.pad(conv_b.astype(jnp.float32),
                 ((0, F_pad - F),)).reshape(1, F_pad)             # [1,F_pad]
    fw = jnp.pad(fc_w.astype(jnp.float32),
                 ((0, F_pad - F), (0, NC_pad - n_class)))         # [F_pad,NC_pad]
    fb = jnp.pad(fc_b.astype(jnp.float32),
                 ((0, NC_pad - n_class),)).reshape(1, NC_pad)     # [1,NC_pad]

    tile_rows = _pick_row_tile(HW)
    T = HW // tile_rows
    inv_hw = 1.0 / float(HW)

    def kernel(patches_ref, cw_ref, cb_ref, fw_ref, fb_ref, o_ref, acc_ref):
        t = pl.program_id(1)

        # Zero the pooled-sum accumulator at the start of each image.
        @pl.when(t == 0)
        def _():
            acc_ref[...] = jnp.zeros_like(acc_ref)

        # Stem conv as im2col matmul + bias + ReLU : [tile_rows, F_pad]
        feat = jnp.dot(patches_ref[0], cw_ref[...],
                       preferred_element_type=jnp.float32)
        feat = jnp.maximum(feat + cb_ref[...], 0.0)

        # Partial global-average-pool: accumulate per-tile column sums
        # (sublane reduction -> XLU; broadcast-add into the [8, F_pad] scratch).
        acc_ref[...] += jnp.sum(feat, axis=0, keepdims=True)

        # Epilogue only: finish the mean and apply the replaced classifier.
        @pl.when(t == pl.num_programs(1) - 1)
        def _():
            pooled = acc_ref[...] * inv_hw                        # [8, F_pad]
            logits = jnp.dot(pooled, fw_ref[...],
                             preferred_element_type=jnp.float32) + fb_ref[...]
            o_ref[...] = logits[None]                             # [1, 8, NC_pad]

    flops = 2 * B * HW * K8 * F_pad + 2 * B * 8 * F_pad * NC_pad
    bytes_accessed = 4 * (patches.size + cw.size + cb.size + fw.size + fb.size
                          + B * 8 * NC_pad)

    out = pl.pallas_call(
        kernel,
        out_shape=jax.ShapeDtypeStruct((B, 8, NC_pad), jnp.float32),
        grid_spec=pltpu.PrefetchScalarGridSpec(
            num_scalar_prefetch=0,
            grid=(B, T),
            in_specs=[
                # Last dim K8 equals the full array dim -> allowed without
                # 128 padding; this is the only array streamed per grid step.
                pl.BlockSpec((1, tile_rows, K8), lambda b, t: (b, t, 0)),
                pl.BlockSpec((K8, F_pad), lambda b, t: (0, 0)),
                pl.BlockSpec((1, F_pad), lambda b, t: (0, 0)),
                pl.BlockSpec((F_pad, NC_pad), lambda b, t: (0, 0)),
                pl.BlockSpec((1, NC_pad), lambda b, t: (0, 0)),
            ],
            out_specs=pl.BlockSpec((1, 8, NC_pad), lambda b, t: (b, 0, 0)),
            scratch_shapes=[pltpu.VMEM((8, F_pad), jnp.float32)],
        ),
        compiler_params=pltpu.CompilerParams(
            dimension_semantics=("parallel", "arbitrary")),
        cost_estimate=pl.CostEstimate(flops=flops, transcendentals=0,
                                      bytes_accessed=bytes_accessed),
    )(patches, cw, cb, fw, fb)

    # Drop the lane/sublane padding (kernel stores lane-dense slabs).
    return out[:, 0, :n_class]


def init_params(key, C=4, F=32, n_class=5):
    k1, k2, k3, k4 = jax.random.split(key, 4)
    conv_w = jax.random.normal(k1, (9 * C, F), jnp.float32) * 0.05
    conv_b = jax.random.normal(k2, (F,), jnp.float32) * 0.01
    fc_w = jax.random.normal(k3, (F, n_class), jnp.float32) * 0.05
    fc_b = jax.random.normal(k4, (n_class,), jnp.float32) * 0.01
    return conv_w, conv_b, fc_w, fc_b


def _reference(x_nchw, params):
    """Pure-JAX reference for correctness check."""
    conv_w, conv_b, fc_w, fc_b = params
    B, C, H, W = x_nchw.shape
    x = jnp.transpose(x_nchw, (0, 2, 3, 1))
    xp = jnp.pad(x, ((0, 0), (1, 1), (1, 1), (0, 0)))
    taps = [xp[:, i:i + H, j:j + W, :] for i in range(3) for j in range(3)]
    patches = jnp.concatenate(taps, axis=-1).reshape(B * H * W, 9 * C)
    feat = jnp.maximum(patches @ conv_w + conv_b, 0.0)
    pooled = feat.reshape(B, H * W, -1).mean(axis=1)
    return pooled @ fc_w + fc_b


if __name__ == "__main__":
    key = jax.random.PRNGKey(0)
    kx, kp = jax.random.split(key)

    B, C, H, W = 2, 4, 16, 16
    n_class = 5
    x = jax.random.normal(kx, (B, C, H, W), jnp.float32)
    params = init_params(kp, C=C, F=32, n_class=n_class)

    out = cassva_forward(x, params)
    out = jax.block_until_ready(out)

    ref = _reference(x, params)
    assert out.shape == (B, n_class)
    assert jnp.allclose(out, ref, atol=1e-4, rtol=1e-4), "mismatch vs reference"

    print("KERNEL_OK")
</pallas_src>

<mosaic_0001>
module attributes {stable_mosaic.version = 11 : i64} {
  func.func @kernel(%arg0: i32, %arg1: i32, %arg2: memref<1x128x40xf32, #tpu.memory_space<vmem>>, %arg3: memref<40x128xf32, #tpu.memory_space<vmem>>, %arg4: memref<1x128xf32, #tpu.memory_space<vmem>>, %arg5: memref<128x128xf32, #tpu.memory_space<vmem>>, %arg6: memref<1x128xf32, #tpu.memory_space<vmem>>, %arg7: memref<1x8x128xf32, #tpu.memory_space<vmem>>, %arg8: memref<8x128xf32, #tpu.memory_space<vmem>>) attributes {dimension_semantics = [#tpu.dimension_semantics<parallel>, #tpu.dimension_semantics<arbitrary>], iteration_bounds = array<i64: 2, 2>, scalar_prefetch = 0 : i64, scratch_operands = 1 : i64, tpu.core_type = #tpu.core_type<tc>, window_params = [{transform_indices = @transform_0, window_bounds = array<i64: 1, 128, 40>}, {pipeline_mode = #tpu.pipeline_mode<synchronous>, transform_indices = @transform_1, window_bounds = array<i64: 40, 128>}, {pipeline_mode = #tpu.pipeline_mode<synchronous>, transform_indices = @transform_2, window_bounds = array<i64: 1, 128>}, {pipeline_mode = #tpu.pipeline_mode<synchronous>, transform_indices = @transform_3, window_bounds = array<i64: 128, 128>}, {pipeline_mode = #tpu.pipeline_mode<synchronous>, transform_indices = @transform_4, window_bounds = array<i64: 1, 128>}, {transform_indices = @transform_5, window_bounds = array<i64: 1, 8, 128>}]} {
    %c0_i32 = arith.constant 0 : i32
    %0 = arith.cmpi eq, %arg1, %c0_i32 : i32
    %1 = arith.extui %0 : i1 to i32
    %c0_i32_0 = arith.constant 0 : i32
    %2 = arith.cmpi ne, %1, %c0_i32_0 : i32
    scf.if %2 {
      %cst_14 = arith.constant 0.000000e+00 : f32
      %21 = vector.broadcast %cst_14 : f32 to vector<8x128xf32>
      %c0_15 = arith.constant 0 : index
      %c0_16 = arith.constant 0 : index
      %22 = vector.load %arg8[%c0_15, %c0_16] : memref<8x128xf32, #tpu.memory_space<vmem>>, vector<8x128xf32>
      tpu.vector_store %arg8[%c0_15, %c0_16], %21 {strides = array<i32>} : memref<8x128xf32, #tpu.memory_space<vmem>>, vector<8x128xf32>,
    } else {
    }
    %c0 = arith.constant 0 : index
    %c0_1 = arith.constant 0 : index
    %c0_2 = arith.constant 0 : index
    %3 = vector.load %arg2[%c0, %c0_1, %c0_2] : memref<1x128x40xf32, #tpu.memory_space<vmem>>, vector<1x128x40xf32>
    %4 = vector.shape_cast %3 : vector<1x128x40xf32> to vector<128x40xf32>
    %c0_3 = arith.constant 0 : index
    %c0_4 = arith.constant 0 : index
    %5 = vector.load %arg3[%c0_3, %c0_4] : memref<40x128xf32, #tpu.memory_space<vmem>>, vector<40x128xf32>
    %cst = arith.constant dense<0.000000e+00> : vector<128x128xf32>
    %6 = tpu.matmul %4, %5, %cst {dimension_numbers = #tpu.dot_dimension_numbers<[1], [0], [0], [1], [0, 0, 1, 1], [], []>} : vector<128x40xf32>, vector<40x128xf32>, vector<128x128xf32> -> vector<128x128xf32>
    %c0_5 = arith.constant 0 : index
    %c0_6 = arith.constant 0 : index
    %7 = vector.load %arg4[%c0_5, %c0_6] : memref<1x128xf32, #tpu.memory_space<vmem>>, vector<1x128xf32>
    %8 = vector.broadcast %7 : vector<1x128xf32> to vector<128x128xf32>
    %9 = arith.addf %6, %8 : vector<128x128xf32>
    %cst_7 = arith.constant 0.000000e+00 : f32
    %10 = vector.broadcast %cst_7 : f32 to vector<128x128xf32>
    %11 = arith.maximumf %9, %10 : vector<128x128xf32>
    %c0_8 = arith.constant 0 : index
    %c0_9 = arith.constant 0 : index
    %12 = vector.load %arg8[%c0_8, %c0_9] : memref<8x128xf32, #tpu.memory_space<vmem>>, vector<8x128xf32>
    %cst_10 = arith.constant dense<0.000000e+00> : vector<128xf32>
    %13 = vector.multi_reduction <add>, %11, %cst_10 [0] : vector<128x128xf32> to vector<128xf32>
    %14 = vector.shape_cast %13 : vector<128xf32> to vector<1x128xf32>
    %15 = vector.broadcast %14 : vector<1x128xf32> to vector<8x128xf32>
    %16 = arith.addf %12, %15 : vector<8x128xf32>
    %c0_11 = arith.constant 0 : index
    %c0_12 = arith.constant 0 : index
    %17 = vector.load %arg8[%c0_11, %c0_12] : memref<8x128xf32, #tpu.memory_space<vmem>>, vector<8x128xf32>
    tpu.vector_store %arg8[%c0_11, %c0_12], %16 {strides = array<i32>} : memref<8x128xf32, #tpu.memory_space<vmem>>, vector<8x128xf32>,
    %c1_i32 = arith.constant 1 : i32
    %18 = arith.cmpi eq, %arg1, %c1_i32 : i32
    %19 = arith.extui %18 : i1 to i32
    %c0_i32_13 = arith.constant 0 : i32
    %20 = arith.cmpi ne, %19, %c0_i32_13 : i32
    scf.if %20 {
      %c0_14 = arith.constant 0 : index
      %c0_15 = arith.constant 0 : index
      %21 = vector.load %arg8[%c0_14, %c0_15] : memref<8x128xf32, #tpu.memory_space<vmem>>, vector<8x128xf32>
      %cst_16 = arith.constant 3.906250e-03 : f32
      %22 = vector.broadcast %cst_16 : f32 to vector<8x128xf32>
      %23 = arith.mulf %21, %22 : vector<8x128xf32>
      %c0_17 = arith.constant 0 : index
      %c0_18 = arith.constant 0 : index
      %24 = vector.load %arg5[%c0_17, %c0_18] : memref<128x128xf32, #tpu.memory_space<vmem>>, vector<128x128xf32>
      %cst_19 = arith.constant dense<0.000000e+00> : vector<8x128xf32>
      %25 = tpu.matmul %23, %24, %cst_19 {dimension_numbers = #tpu.dot_dimension_numbers<[1], [0], [0], [1], [0, 0, 1, 1], [], []>} : vector<8x128xf32>, vector<128x128xf32>, vector<8x128xf32> -> vector<8x128xf32>
      %c0_20 = arith.constant 0 : index
      %c0_21 = arith.constant 0 : index
      %26 = vector.load %arg6[%c0_20, %c0_21] : memref<1x128xf32, #tpu.memory_space<vmem>>, vector<1x128xf32>
      %27 = vector.broadcast %26 : vector<1x128xf32> to vector<8x128xf32>
      %28 = arith.addf %25, %27 : vector<8x128xf32>
      %29 = vector.shape_cast %28 : vector<8x128xf32> to vector<1x8x128xf32>
      %c0_22 = arith.constant 0 : index
      %c0_23 = arith.constant 0 : index
      %c0_24 = arith.constant 0 : index
      %30 = vector.load %arg7[%c0_22, %c0_23, %c0_24] : memref<1x8x128xf32, #tpu.memory_space<vmem>>, vector<1x8x128xf32>
      tpu.vector_store %arg7[%c0_22, %c0_23, %c0_24], %29 {strides = array<i32>} : memref<1x8x128xf32, #tpu.memory_space<vmem>>, vector<1x8x128xf32>,
    } else {
    }
    return
  }
  func.func @transform_0(%arg0: i32, %arg1: i32) -> (i32, i32, i32) {
    %c0_i32 = arith.constant 0 : i32
    %c0_i32_0 = arith.constant 0 : i32
    return %arg0, %arg1, %c0_i32 : i32, i32, i32
  }
  func.func @transform_1(%arg0: i32, %arg1: i32) -> (i32, i32) {
    %c0_i32 = arith.constant 0 : i32
    %c0_i32_0 = arith.constant 0 : i32
    %c0_i32_1 = arith.constant 0 : i32
    return %c0_i32, %c0_i32_0 : i32, i32
  }
  func.func @transform_2(%arg0: i32, %arg1: i32) -> (i32, i32) {
    %c0_i32 = arith.constant 0 : i32
    %c0_i32_0 = arith.constant 0 : i32
    %c0_i32_1 = arith.constant 0 : i32
    return %c0_i32, %c0_i32_0 : i32, i32
  }
  func.func @transform_3(%arg0: i32, %arg1: i32) -> (i32, i32) {
    %c0_i32 = arith.constant 0 : i32
    %c0_i32_0 = arith.constant 0 : i32
    %c0_i32_1 = arith.constant 0 : i32
    return %c0_i32, %c0_i32_0 : i32, i32
  }
  func.func @transform_4(%arg0: i32, %arg1: i32) -> (i32, i32) {
    %c0_i32 = arith.constant 0 : i32
    %c0_i32_0 = arith.constant 0 : i32
    %c0_i32_1 = arith.constant 0 : i32
    return %c0_i32, %c0_i32_0 : i32, i32
  }
  func.func @transform_5(%arg0: i32, %arg1: i32) -> (i32, i32, i32) {
    %c0_i32 = arith.constant 0 : i32
    %c0_i32_0 = arith.constant 0 : i32
    %c0_i32_1 = arith.constant 0 : i32
    return %arg0, %c0_i32, %c0_i32_0 : i32, i32, i32
  }
}

</mosaic_0001>

<llo_original>
// kernel: tpu_custom_call.1
$region0: #{tpu_custom_call.1}
  #allocation0 [shape = 'u32[]', space=smem, size = 0x4, offset = 0x4, fixed_abs, tag = 'smem constant byte address 0x4 - core index']
  #allocation1 [shape = 'u32[144,128]{1,0:T(1,128)}', space=vmem, size = 0x12000, scoped, tag = 'internal scratch']
  #allocation2 [shape = 'f32[8,128]{1,0:T(8,128)}', space=vmem, size = 0x1000, scoped, tag = 'scratch operand']
  %s0 = inlined_call_operand.vmem [shape: f32[2,256,40], index: 0, kind: input, shape index: {}]
  %s1 = inlined_call_operand.vmem [shape: f32[40,128], index: 1, kind: input, shape index: {}]
  %s2 = inlined_call_operand.vmem [shape: f32[1,128], index: 2, kind: input, shape index: {}]
  %s3 = inlined_call_operand.vmem [shape: f32[128,128], index: 3, kind: input, shape index: {}]
  %s4 = inlined_call_operand.vmem [shape: f32[1,128], index: 4, kind: input, shape index: {}]
  %s5 = inlined_call_operand.hbm [shape: f32[2,8,128], index: 5, kind: output, shape index: {}]
  %s6 = sld [smem:[#allocation0]]
  $region61: #{tpu_custom_call.1} parent=0
    _
  %s8 = ssub.s32 1, %s6
  %s9 = scalar_select 0, %s8, %s6
  $region1: #{tpu_custom_call.1} parent=0
    #allocation3 [shape = 'u8[8192]{0}', space=vmem, size = 0x2000, scoped, tag = 'output window, operand 0']
    #allocation4 [shape = 's32[2]{0}', space=sflag, size = 0x8, scoped, tag = 'scoped memory for tpu_custom_call.1']
    %10 = vsyncpa [#allocation4], 0
    %s11 = scalar_lea.sflag [#allocation4], 1
    %12 = vsyncpa %s11, 0
    loop: start=0, step=1, limit=6
    $region2: #{tpu_custom_call.1} parent=1 // loop_pre_header
      _
    $region3: #{tpu_custom_call.1} parent=1 // loop_header
      %s14 = sphi 0, %s18
      %p15 = scmp.ge.s32.totalorder %s14, 6
      %s21 = sphi 0, %s33
      %s22 = sphi 0, %s29
      %s23 = sphi 0, %s21
      %s24 = sphi 0, %s22
      %s25 = sphi 0, %s23
      %s26 = sphi 0, %s24
      %s38 = sphi 0, %s40
      %s41 = sphi 0, %s38
      %s42 = sphi 0, %s41
      %s58 = sphi 0, %s42
      %s62 = sphi 0, %s62
      %s64 = sphi 0, %s62
      %s65 = sphi 0, %s64
      %s79 = sphi 0, %s65
      %s83 = sphi 0, %s83
      %s85 = sphi 0, %s83
      %s86 = sphi 0, %s85
      %s100 = sphi 0, %s86
      %s104 = sphi 0, %s104
      %s106 = sphi 0, %s104
      %s107 = sphi 0, %s106
      %s121 = sphi 0, %s107
      %s125 = sphi 0, %s125
      %s127 = sphi 0, %s125
      %s128 = sphi 0, %s127
      %s142 = sphi 0, %s128
      %s148 = sphi 0, %s150
      %s151 = sphi 0, %s148
      %s152 = sphi 0, %s151
      %s168 = sphi 0, %s152
    $region4: #{tpu_custom_call.1} parent=1 // loop_header_branch
      %17 = sbr.rel (%p15) target = $region8
    $region5: #{tpu_custom_call.1} parent=1 // loop_body
      %s19 = ssub.s32 %s14, 1
      %s20 = ssub.s32 %s14, 2
      %s27 = sadd.s32 1, %s22
      %p28 = scmp.ge.s32.totalorder %s27, 2
      %s29 = scalar_select %p28, 0, %s27
      %s30 = sadd.s32 1, %s21
      %s31 = scalar_select %p28, %s30, %s21
      %p32 = scmp.ge.s32.totalorder %s31, 2
      %s33 = scalar_select %p32, 0, %s31
      %s34 = ssub.s32 %s21, %s33
      %s35 = ssub.s32 %s22, %s29
      %s36 = sor.u32 %s34, %s35
      %p37 = scmp.eq.s32.totalorder %s36, 0
      %s39 = sadd.s32 %s38, 1
      %s40 = scalar_select %p37, %s38, %s39
      %p43 = pneg %p37
      %p44 = scmp.eq.s32.totalorder %s14, 3
      %p45 = por %p43, %p44
      %p46 = scmp.ne.s32.totalorder %s38, %s41
      %p47 = scmp.eq.s32.totalorder %s14, 0
      %p48 = por %p46, %p47
      %p49 = scmp.ne.s32.totalorder %s38, %s41
      %p50 = scmp.eq.s32.totalorder %s19, 3
      %p51 = por %p49, %p50
      %p52 = scmp.ne.s32.totalorder %s41, %s42
      %p53 = scmp.eq.s32.totalorder %s19, 0
      %p54 = por %p52, %p53
      %p55 = scmp.ne.s32.totalorder %s41, %s42
      %p56 = scmp.eq.s32.totalorder %s20, 3
      %p57 = por %p55, %p56
      %p59 = scmp.ne.s32.totalorder %s42, %s58
      %p60 = scmp.eq.s32.totalorder %s20, 0
      %p61 = por %p59, %p60
      %s63 = sadd.s32 %s62, 1
      %p66 = scmp.eq.s32.totalorder %s14, 3
      %p67 = scmp.ne.s32.totalorder %s62, %s64
      %p68 = scmp.eq.s32.totalorder %s14, 0
      %p69 = por %p67, %p68
      %p70 = scmp.ne.s32.totalorder %s62, %s64
      %p71 = scmp.eq.s32.totalorder %s19, 3
      %p72 = por %p70, %p71
      %p73 = scmp.ne.s32.totalorder %s64, %s65
      %p74 = scmp.eq.s32.totalorder %s19, 0
      %p75 = por %p73, %p74
      %p76 = scmp.ne.s32.totalorder %s64, %s65
      %p77 = scmp.eq.s32.totalorder %s20, 3
      %p78 = por %p76, %p77
      %p80 = scmp.ne.s32.totalorder %s65, %s79
      %p81 = scmp.eq.s32.totalorder %s20, 0
      %p82 = por %p80, %p81
      %s84 = sadd.s32 %s83, 1
      %p87 = scmp.eq.s32.totalorder %s14, 3
      %p88 = scmp.ne.s32.totalorder %s83, %s85
      %p89 = scmp.eq.s32.totalorder %s14, 0
      %p90 = por %p88, %p89
      %p91 = scmp.ne.s32.totalorder %s83, %s85
      %p92 = scmp.eq.s32.totalorder %s19, 3
      %p93 = por %p91, %p92
      %p94 = scmp.ne.s32.totalorder %s85, %s86
      %p95 = scmp.eq.s32.totalorder %s19, 0
      %p96 = por %p94, %p95
      %p97 = scmp.ne.s32.totalorder %s85, %s86
      %p98 = scmp.eq.s32.totalorder %s20, 3
      %p99 = por %p97, %p98
      %p101 = scmp.ne.s32.totalorder %s86, %s100
      %p102 = scmp.eq.s32.totalorder %s20, 0
      %p103 = por %p101, %p102
      %s105 = sadd.s32 %s104, 1
      %p108 = scmp.eq.s32.totalorder %s14, 3
      %p109 = scmp.ne.s32.totalorder %s104, %s106
      %p110 = scmp.eq.s32.totalorder %s14, 0
      %p111 = por %p109, %p110
      %p112 = scmp.ne.s32.totalorder %s104, %s106
      %p113 = scmp.eq.s32.totalorder %s19, 3
      %p114 = por %p112, %p113
      %p115 = scmp.ne.s32.totalorder %s106, %s107
      %p116 = scmp.eq.s32.totalorder %s19, 0
      %p117 = por %p115, %p116
      %p118 = scmp.ne.s32.totalorder %s106, %s107
      %p119 = scmp.eq.s32.totalorder %s20, 3
      %p120 = por %p118, %p119
      %p122 = scmp.ne.s32.totalorder %s107, %s121
      %p123 = scmp.eq.s32.totalorder %s20, 0
      %p124 = por %p122, %p123
      %s126 = sadd.s32 %s125, 1
      %p129 = scmp.eq.s32.totalorder %s14, 3
      %p130 = scmp.ne.s32.totalorder %s125, %s127
      %p131 = scmp.eq.s32.totalorder %s14, 0
      %p132 = por %p130, %p131
      %p133 = scmp.ne.s32.totalorder %s125, %s127
      %p134 = scmp.eq.s32.totalorder %s19, 3
      %p135 = por %p133, %p134
      %p136 = scmp.ne.s32.totalorder %s127, %s128
      %p137 = scmp.eq.s32.totalorder %s19, 0
      %p138 = por %p136, %p137
      %p139 = scmp.ne.s32.totalorder %s127, %s128
      %p140 = scmp.eq.s32.totalorder %s20, 3
      %p141 = por %p139, %p140
      %p143 = scmp.ne.s32.totalorder %s128, %s142
      %p144 = scmp.eq.s32.totalorder %s20, 0
      %p145 = por %p143, %p144
      %s146 = ssub.s32 %s21, %s33
      %p147 = scmp.eq.s32.totalorder %s146, 0
      %s149 = sadd.s32 %s148, 1
      %s150 = scalar_select %p147, %s148, %s149
      %p153 = pneg %p147
      %p154 = scmp.eq.s32.totalorder %s14, 3
      %p155 = por %p153, %p154
      %p156 = scmp.ne.s32.totalorder %s148, %s151
      %p157 = scmp.eq.s32.totalorder %s14, 0
      %p158 = por %p156, %p157
      %p159 = scmp.ne.s32.totalorder %s148, %s151
      %p160 = scmp.eq.s32.totalorder %s19, 3
      %p161 = por %p159, %p160
      %p162 = scmp.ne.s32.totalorder %s151, %s152
      %p163 = scmp.eq.s32.totalorder %s19, 0
      %p164 = por %p162, %p163
      %p165 = scmp.ne.s32.totalorder %s151, %s152
      %p166 = scmp.eq.s32.totalorder %s20, 3
      %p167 = por %p165, %p166
      %p169 = scmp.ne.s32.totalorder %s152, %s168
      %p170 = scmp.eq.s32.totalorder %s20, 0
      %p171 = por %p169, %p170
      %p172 = scmp.le.s32.totalorder 1, %s14
      %p173 = scmp.lt.s32.totalorder %s14, 5
      %p174 = pnand %p172, %p173
      %p175 = pneg %p174
      // Predicated region
      $region9: #{tpu_custom_call.1} parent=5 // pred_check
        _
      $region10: #{tpu_custom_call.1} parent=5 // pred_check_branch
        %177 = sbr.rel (%p174) target = $region12
      $region11: #{tpu_custom_call.1} parent=5 // pred_region
        %s178 = ssub.s32 %s14, 1
        // Predicated region
        $region13: #{tpu_custom_call.1} parent=11 // pred_check
          %p179 = pneg %p75
        $region14: #{tpu_custom_call.1} parent=11 // pred_check_branch
          %181 = sbr.rel (%p179) target = $region16
        $region15: #{tpu_custom_call.1} parent=11 // pred_region
          _
        $region16: #{tpu_custom_call.1} parent=11 // pred_fallthru
          _
        // Predicated region
        $region17: #{tpu_custom_call.1} parent=11 // pred_check
          %p182 = pneg %p96
        $region18: #{tpu_custom_call.1} parent=11 // pred_check_branch
          %184 = sbr.rel (%p182) target = $region20
        $region19: #{tpu_custom_call.1} parent=11 // pred_region
          _
        $region20: #{tpu_custom_call.1} parent=11 // pred_fallthru
          _
        // Predicated region
        $region21: #{tpu_custom_call.1} parent=11 // pred_check
          %p185 = pneg %p117
        $region22: #{tpu_custom_call.1} parent=11 // pred_check_branch
          %187 = sbr.rel (%p185) target = $region24
        $region23: #{tpu_custom_call.1} parent=11 // pred_region
          _
        $region24: #{tpu_custom_call.1} parent=11 // pred_fallthru
          _
        // Predicated region
        $region25: #{tpu_custom_call.1} parent=11 // pred_check
          %p188 = pneg %p138
        $region26: #{tpu_custom_call.1} parent=11 // pred_check_branch
          %190 = sbr.rel (%p188) target = $region28
        $region27: #{tpu_custom_call.1} parent=11 // pred_region
          _
        $region28: #{tpu_custom_call.1} parent=11 // pred_fallthru
          _
      $region12: #{tpu_custom_call.1} parent=5 // pred_fallthru
        _
      %p191 = scmp.lt.s32.totalorder %s14, 4
      // Predicated region
      $region29: #{tpu_custom_call.1} parent=5 // pred_check
        %p192 = pneg %p191
      $region30: #{tpu_custom_call.1} parent=5 // pred_check_branch
        %194 = sbr.rel (%p192) target = $region32
      $region31: #{tpu_custom_call.1} parent=5 // pred_region
        // Predicated region
        $region33: #{tpu_custom_call.1} parent=31 // pred_check
          %p195 = pneg %p48
        $region34: #{tpu_custom_call.1} parent=31 // pred_check_branch
          %197 = sbr.rel (%p195) target = $region36
        $region35: #{tpu_custom_call.1} parent=31 // pred_region
          %s198 = smul.u32 16, %s22
          %p199 = scmp.lt.s32.totalorder %s21, 1
          %s200 = scalar_select %p199, %s21, 1
          %p201 = scmp.lt.s32.totalorder %s198, 31
          %s202 = scalar_select %p201, %s198, 31
          %s203 = smul.addr %s200, 32
          %s204 = sadd.s32 %s202, %s203
          %s205 = smul.addr %s204, 8
          %s206 = scalar_lea.vmem %s0, %s205
          %s207 = smul.u32 16, %s22
        $region36: #{tpu_custom_call.1} parent=31 // pred_fallthru
          _
      $region32: #{tpu_custom_call.1} parent=5 // pred_fallthru
        _
      %p208 = scmp.le.s32.totalorder 1, %s14
      %p209 = scmp.lt.s32.totalorder %s14, 5
      %p210 = pnand %p208, %p209
      %p211 = pneg %p210
      // Predicated region
      $region37: #{tpu_custom_call.1} parent=5 // pred_check
        _
      $region38: #{tpu_custom_call.1} parent=5 // pred_check_branch
        %213 = sbr.rel (%p210) target = $region40
      $region39: #{tpu_custom_call.1} parent=5 // pred_region
        %s214 = ssub.s32 %s14, 1
        %s215 = smul.u32 16, %s24
        %p216 = scmp.lt.s32.totalorder %s23, 1
        %s217 = scalar_select %p216, %s23, 1
        %p218 = scmp.lt.s32.totalorder %s215, 31
        %s219 = scalar_select %p218, %s215, 31
        %s220 = smul.addr %s217, 32
        %s221 = sadd.s32 %s219, %s220
        %s222 = smul.addr %s221, 8
        %s223 = scalar_lea.vmem %s0, %s222
        %p224 = pneg %p54
        %p225 = pneg %p51
        %p226 = pneg %p75
        %p227 = pneg %p72
        %p228 = pneg %p96
        %p229 = pneg %p93
        %p230 = pneg %p117
        %p231 = pneg %p114
        %p232 = pneg %p138
        %p233 = pneg %p135
        %p234 = pneg %p164
        %p235 = pneg %p161
        %s236 = sand.u32 %s151, 1
        %s237 = scalar_lea.sflag [#allocation4], %s236
        %s238 = sand.u32 %s151, 1
        %s239 = smul.addr %s238, 8
        %s240 = scalar_lea.vmem [#allocation3], %s239
        %s241 = smul.u32 16, %s24
        %p242 = scmp.lt.s32.totalorder %s23, 1
        %s243 = scalar_select %p242, %s23, 1
        %p244 = scmp.lt.s32.totalorder %s241, 31
        %s245 = scalar_select %p244, %s241, 31
        %s246 = smul.addr %s243, 32
        %s247 = sadd.s32 %s245, %s246
        %s248 = smul.addr %s247, 8
        %s249 = scalar_lea.vmem %s0, %s248
        %s250 = smul.u32 16, %s24
        %p251 = scmp.eq.s32.totalorder %s24, 0
        // Predicated region
        $region41: #{tpu_custom_call.1} parent=39 // pred_check
          %p252 = pneg %p251
        $region42: #{tpu_custom_call.1} parent=39 // pred_check_branch
          %254 = sbr.rel (%p252) target = $region44
        $region43: #{tpu_custom_call.1} parent=39 // pred_region
          %255 = vst [vmem:[#allocation2] sm:$0xff] 0.0
        $region44: #{tpu_custom_call.1} parent=39 // pred_fallthru
          _
        %v256 = vld [vmem:[%s249] sm:$0xff]
        %v257 = vld [vmem:[%s249 + $0x8] sm:$0xff]
        %v258 = vld [vmem:[%s249 + $0x10] sm:$0xff]
        %v259 = vld [vmem:[%s249 + $0x18] sm:$0xff]
        %v260 = vld [vmem:[%s249 + $0x20] sm:$0xff]
        %v261 = vld [vmem:[%s249 + $0x28] sm:$0xff]
        %v262 = vld [vmem:[%s249 + $0x30] sm:$0xff]
        %v263 = vld [vmem:[%s249 + $0x38] sm:$0xff]
        %v264 = vld [vmem:[%s249 + $0x40] sm:$0xff]
        %v265 = vld [vmem:[%s249 + $0x48] sm:$0xff]
        %v266 = vld [vmem:[%s249 + $0x50] sm:$0xff]
        %v267 = vld [vmem:[%s249 + $0x58] sm:$0xff]
        %v268 = vld [vmem:[%s249 + $0x60] sm:$0xff]
        %v269 = vld [vmem:[%s249 + $0x68] sm:$0xff]
        %v270 = vld [vmem:[%s249 + $0x70] sm:$0xff]
        %v271 = vld [vmem:[%s249 + $0x78] sm:$0xff]
        %v272 = vld [vmem:[%s1] sm:$0xff]
        %v273 = vld [vmem:[%s1 + $0x8] sm:$0xff]
        %v274 = vld [vmem:[%s1 + $0x10] sm:$0xff]
        %v275 = vld [vmem:[%s1 + $0x18] sm:$0xff]
        %v276 = vld [vmem:[%s1 + $0x20] sm:$0xff]
        %v277 = vld [vmem:[%s2] sm:$0x1]
        %v279 = vlaneseq
        %v280 = vshrl.u32 %v279, 7
        %v281 = vsub.s32 0, %v280
        %v282 = vrot.slane %v277, %v281
        %vm284 = vcmask 326656
        %v286 = vsel %vm284, %v256, 0
        %v289 = vsel %vm284, %v257, 0
        %v292 = vsel %vm284, %v258, 0
        %v295 = vsel %vm284, %v259, 0
        %v298 = vsel %vm284, %v260, 0
        %v301 = vsel %vm284, %v261, 0
        %v304 = vsel %vm284, %v262, 0
        %v307 = vsel %vm284, %v263, 0
        %v310 = vsel %vm284, %v264, 0
        %v313 = vsel %vm284, %v265, 0
        %v316 = vsel %vm284, %v266, 0
        %v319 = vsel %vm284, %v267, 0
        %v322 = vsel %vm284, %v268, 0
        %v325 = vsel %vm284, %v269, 0
        %v328 = vsel %vm284, %v270, 0
        %v331 = vsel %vm284, %v271, 0
        %333 = vmatprep.subr.mxu0 0.0
        %334 = vmatpush1.msra.mxu0 %v272
        %335 = vmatprep.subr.mxu0 0.0
        %336 = vmatpush1.msra.mxu0 %v273
        %337 = vmatprep.subr.mxu0 0.0
        %338 = vmatpush1.msra.mxu0 %v274
        %339 = vmatprep.subr.mxu0 0.0
        %340 = vmatpush1.msra.mxu0 %v275
        %341 = vmatprep.subr.mxu0 0.0
        %342 = vmatpush1.msra.mxu0 %v276
        %343 = vmatprep.subr.mxu0 0.0
        %344 = vmatpush1.msra.mxu0 0.0
        %345 = vmatprep.subr.mxu0 0.0
        %346 = vmatpush1.msra.mxu0 0.0
        %347 = vmatprep.subr.mxu0 0.0
        %348 = vmatpush1.msra.mxu0 0.0
        %349 = vmatprep.subr.mxu0 0.0
        %350 = vmatpush1.msra.mxu0 0.0
        %351 = vmatprep.subr.mxu0 0.0
        %352 = vmatpush1.msra.mxu0 0.0
        %353 = vmatprep.subr.mxu0 0.0
        %354 = vmatpush1.msra.mxu0 0.0
        %355 = vmatprep.subr.mxu0 0.0
        %356 = vmatpush1.msra.mxu0 0.0
        %357 = vmatprep.subr.mxu0 0.0
        %358 = vmatpush1.msra.mxu0 0.0
        %359 = vmatprep.subr.mxu0 0.0
        %360 = vmatpush1.msra.mxu0 0.0
        %361 = vmatprep.subr.mxu0 0.0
        %362 = vmatpush1.msra.mxu0 0.0
        %363 = vmatprep.subr.mxu0 0.0
        %364 = vmatpush1.msra.mxu0 0.0
        %365 = vmatprep.subr.mxu0 0.0
        %366 = vmatpush1.msra.mxu0 0.0
        %367 = vmatprep.subr.mxu0 0.0
        %368 = vmatpush1.msra.mxu0 0.0
        %369 = vmatprep.subr.mxu0 0.0
        %370 = vmatpush1.msra.mxu0 0.0
        %371 = vmatprep.subr.mxu0 0.0
        %372 = vmatpush1.msra.mxu0 0.0
        %373 = vmatprep.subr.mxu0 0.0
        %374 = vmatpush1.msra.mxu0 0.0
        %375 = vmatprep.subr.mxu0 0.0
        %376 = vmatpush1.msra.mxu0 0.0
        %377 = vmatprep.subr.mxu0 0.0
        %378 = vmatpush1.msra.mxu0 0.0
        %379 = vmatprep.subr.mxu0 0.0
        %380 = vmatpush1.msra.mxu0 0.0
        %381 = vmatprep.subr.mxu0 0.0
        %382 = vmatpush1.msra.mxu0 0.0
        %383 = vmatprep.subr.mxu0 0.0
        %384 = vmatpush1.msra.mxu0 0.0
        %385 = vmatprep.subr.mxu0 0.0
        %386 = vmatpush1.msra.mxu0 0.0
        %387 = vmatprep.subr.mxu0 0.0
        %388 = vmatpush1.msra.mxu0 0.0
        %389 = vmatprep.subr.mxu0 0.0
        %390 = vmatpush1.msra.mxu0 0.0
        %391 = vmatprep.subr.mxu0 0.0
        %392 = vmatpush1.msra.mxu0 0.0
        %393 = vmatprep.subr.mxu0 0.0
        %394 = vmatpush1.msra.mxu0 0.0
        %395 = vmatprep.subr.mxu0 0.0
        %396 = vmatpush1.msra.mxu0 0.0
        %397 = vmatprep.mubr.f32.mxu0 0.0
        %398 = vmatmul.mubr.f32.gmra.mrb[0].mxu0 %v286
        %v399 = vpop.f32.mrb[0].mxu0
        %v400 = vadd.f32 %v282, %v399
        %v401 = vpop.f32.mrb[0].mxu0
        %402 = vmatprep.mubr.f32.mxu0 0.0
        %403 = vmatmul.mubr.f32.gmra.mrb[0].mxu0 %v289
        %v404 = vpop.f32.mrb[0].mxu0
        %v405 = vadd.f32 %v282, %v404
        %v406 = vpop.f32.mrb[0].mxu0
        %407 = vmatprep.mubr.f32.mxu0 0.0
        %408 = vmatmul.mubr.f32.gmra.mrb[0].mxu0 %v292
        %v409 = vpop.f32.mrb[0].mxu0
        %v410 = vadd.f32 %v282, %v409
        %v411 = vpop.f32.mrb[0].mxu0
        %412 = vmatprep.mubr.f32.mxu0 0.0
        %413 = vmatmul.mubr.f32.gmra.mrb[0].mxu0 %v295
        %v414 = vpop.f32.mrb[0].mxu0
        %v415 = vadd.f32 %v282, %v414
        %v416 = vpop.f32.mrb[0].mxu0
        %417 = vmatprep.mubr.f32.mxu0 0.0
        %418 = vmatmul.mubr.f32.gmra.mrb[0].mxu0 %v298
        %v419 = vpop.f32.mrb[0].mxu0
        %v420 = vadd.f32 %v282, %v419
        %v421 = vpop.f32.mrb[0].mxu0
        %422 = vmatprep.mubr.f32.mxu0 0.0
        %423 = vmatmul.mubr.f32.gmra.mrb[0].mxu0 %v301
        %v424 = vpop.f32.mrb[0].mxu0
        %v425 = vadd.f32 %v282, %v424
        %v426 = vpop.f32.mrb[0].mxu0
        %427 = vmatprep.mubr.f32.mxu0 0.0
        %428 = vmatmul.mubr.f32.gmra.mrb[0].mxu0 %v304
        %v429 = vpop.f32.mrb[0].mxu0
        %v430 = vadd.f32 %v282, %v429
        %v431 = vpop.f32.mrb[0].mxu0
        %432 = vmatprep.mubr.f32.mxu0 0.0
        %433 = vmatmul.mubr.f32.gmra.mrb[0].mxu0 %v307
        %v434 = vpop.f32.mrb[0].mxu0
        %v435 = vadd.f32 %v282, %v434
        %v436 = vpop.f32.mrb[0].mxu0
        %437 = vmatprep.mubr.f32.mxu0 0.0
        %438 = vmatmul.mubr.f32.gmra.mrb[0].mxu0 %v310
        %v439 = vpop.f32.mrb[0].mxu0
        %v440 = vadd.f32 %v282, %v439
        %v441 = vpop.f32.mrb[0].mxu0
        %442 = vmatprep.mubr.f32.mxu0 0.0
        %443 = vmatmul.mubr.f32.gmra.mrb[0].mxu0 %v313
        %v444 = vpop.f32.mrb[0].mxu0
        %v445 = vadd.f32 %v282, %v444
        %v446 = vpop.f32.mrb[0].mxu0
        %447 = vmatprep.mubr.f32.mxu0 0.0
        %448 = vmatmul.mubr.f32.gmra.mrb[0].mxu0 %v316
        %v449 = vpop.f32.mrb[0].mxu0
        %v450 = vadd.f32 %v282, %v449
        %v451 = vpop.f32.mrb[0].mxu0
        %452 = vmatprep.mubr.f32.mxu0 0.0
        %453 = vmatmul.mubr.f32.gmra.mrb[0].mxu0 %v319
        %v454 = vpop.f32.mrb[0].mxu0
        %v455 = vadd.f32 %v282, %v454
        %v456 = vpop.f32.mrb[0].mxu0
        %457 = vmatprep.mubr.f32.mxu0 0.0
        %458 = vmatmul.mubr.f32.gmra.mrb[0].mxu0 %v322
        %v459 = vpop.f32.mrb[0].mxu0
        %v460 = vadd.f32 %v282, %v459
        %v461 = vpop.f32.mrb[0].mxu0
        %462 = vmatprep.mubr.f32.mxu0 0.0
        %463 = vmatmul.mubr.f32.gmra.mrb[0].mxu0 %v325
        %v464 = vpop.f32.mrb[0].mxu0
        %v465 = vadd.f32 %v282, %v464
        %v466 = vpop.f32.mrb[0].mxu0
        %467 = vmatprep.mubr.f32.mxu0 0.0
        %468 = vmatmul.mubr.f32.gmra.mrb[0].mxu0 %v328
        %v469 = vpop.f32.mrb[0].mxu0
        %v470 = vadd.f32 %v282, %v469
        %v471 = vpop.f32.mrb[0].mxu0
        %472 = vmatprep.mubr.f32.mxu0 0.0
        %473 = vmatmul.mubr.f32.gmra.mrb[0].mxu0 %v331
        %v474 = vpop.f32.mrb[0].mxu0
        %v475 = vadd.f32 %v282, %v474
        %v476 = vpop.f32.mrb[0].mxu0
        %477 = vdwg.mxu0
        %v478 = vmax.f32 %v400, 0.0
        %v479 = vmax.f32 %v405, 0.0
        %v480 = vmax.f32 %v410, 0.0
        %v481 = vmax.f32 %v415, 0.0
        %v482 = vmax.f32 %v420, 0.0
        %v483 = vmax.f32 %v425, 0.0
        %v484 = vmax.f32 %v430, 0.0
        %v485 = vmax.f32 %v435, 0.0
        %v486 = vmax.f32 %v440, 0.0
        %v487 = vmax.f32 %v445, 0.0
        %v488 = vmax.f32 %v450, 0.0
        %v489 = vmax.f32 %v455, 0.0
        %v490 = vmax.f32 %v460, 0.0
        %v491 = vmax.f32 %v465, 0.0
        %v492 = vmax.f32 %v470, 0.0
        %v493 = vmax.f32 %v475, 0.0
        %v494 = vld [vmem:[#allocation2] sm:$0xff]
        %v495 = vadd.f32 %v478, %v479
        %v496 = vadd.f32 %v495, %v480
        %v497 = vadd.f32 %v496, %v481
        %v498 = vadd.f32 %v497, %v482
        %v499 = vadd.f32 %v498, %v483
        %v500 = vadd.f32 %v499, %v484
        %v501 = vadd.f32 %v500, %v485
        %v502 = vadd.f32 %v501, %v486
        %v503 = vadd.f32 %v502, %v487
        %v504 = vadd.f32 %v503, %v488
        %v505 = vadd.f32 %v504, %v489
        %v506 = vadd.f32 %v505, %v490
        %v507 = vadd.f32 %v506, %v491
        %v508 = vadd.f32 %v507, %v492
        %v509 = vadd.f32 %v508, %v493
        %v510 = vrot.slane %v509, 4
        %v511 = vadd.f32 %v509, %v510
        %v512 = vrot.slane %v511, 2
        %v513 = vadd.f32 %v511, %v512
        %v514 = vrot.slane %v513, 1
        %v515 = vadd.f32 %v513, %v514
        %v516 = vadd.f32 %v494, %v515
        %517 = vst [vmem:[#allocation2] sm:$0xff] %v516
        %p518 = scmp.eq.s32.totalorder %s24, 1
        // Predicated region
        $region45: #{tpu_custom_call.1} parent=39 // pred_check
          %p519 = pneg %p518
        $region46: #{tpu_custom_call.1} parent=39 // pred_check_branch
          %521 = sbr.rel (%p519) target = $region48
        $region47: #{tpu_custom_call.1} parent=39 // pred_region
          %v522 = vld [vmem:[#allocation2] sm:$0xff]
          %v523 = vmul.f32 %v522, 0.00390625
          %v524 = vld [vmem:[%s3] sm:$0xff]
          %v525 = vld [vmem:[%s3 + $0x8] sm:$0xff]
          %v526 = vld [vmem:[%s3 + $0x10] sm:$0xff]
          %v527 = vld [vmem:[%s3 + $0x18] sm:$0xff]
          %v528 = vld [vmem:[%s3 + $0x20] sm:$0xff]
          %v529 = vld [vmem:[%s3 + $0x28] sm:$0xff]
          %v530 = vld [vmem:[%s3 + $0x30] sm:$0xff]
          %v531 = vld [vmem:[%s3 + $0x38] sm:$0xff]
          %v532 = vld [vmem:[%s3 + $0x40] sm:$0xff]
          %v533 = vld [vmem:[%s3 + $0x48] sm:$0xff]
          %v534 = vld [vmem:[%s3 + $0x50] sm:$0xff]
          %v535 = vld [vmem:[%s3 + $0x58] sm:$0xff]
          %v536 = vld [vmem:[%s3 + $0x60] sm:$0xff]
          %v537 = vld [vmem:[%s3 + $0x68] sm:$0xff]
          %v538 = vld [vmem:[%s3 + $0x70] sm:$0xff]
          %v539 = vld [vmem:[%s3 + $0x78] sm:$0xff]
          %v540 = vld [vmem:[%s4] sm:$0x1]
          %v542 = vlaneseq
          %v543 = vshrl.u32 %v542, 7
          %v544 = vsub.s32 0, %v543
          %v545 = vrot.slane %v540, %v544
          %547 = vmatprep.subr.mxu0 0.0
          %548 = vmatpush1.msra.mxu0 %v524
          %549 = vmatprep.subr.mxu0 0.0
          %550 = vmatpush1.msra.mxu0 %v525
          %551 = vmatprep.subr.mxu0 0.0
          %552 = vmatpush1.msra.mxu0 %v526
          %553 = vmatprep.subr.mxu0 0.0
          %554 = vmatpush1.msra.mxu0 %v527
          %555 = vmatprep.subr.mxu0 0.0
          %556 = vmatpush1.msra.mxu0 %v528
          %557 = vmatprep.subr.mxu0 0.0
          %558 = vmatpush1.msra.mxu0 %v529
          %559 = vmatprep.subr.mxu0 0.0
          %560 = vmatpush1.msra.mxu0 %v530
          %561 = vmatprep.subr.mxu0 0.0
          %562 = vmatpush1.msra.mxu0 %v531
          %563 = vmatprep.subr.mxu0 0.0
          %564 = vmatpush1.msra.mxu0 %v532
          %565 = vmatprep.subr.mxu0 0.0
          %566 = vmatpush1.msra.mxu0 %v533
          %567 = vmatprep.subr.mxu0 0.0
          %568 = vmatpush1.msra.mxu0 %v534
          %569 = vmatprep.subr.mxu0 0.0
          %570 = vmatpush1.msra.mxu0 %v535
          %571 = vmatprep.subr.mxu0 0.0
          %572 = vmatpush1.msra.mxu0 %v536
          %573 = vmatprep.subr.mxu0 0.0
          %574 = vmatpush1.msra.mxu0 %v537
          %575 = vmatprep.subr.mxu0 0.0
          %576 = vmatpush1.msra.mxu0 %v538
          %577 = vmatprep.subr.mxu0 0.0
          %578 = vmatpush1.msra.mxu0 %v539
          %579 = vmatprep.subr.mxu0 0.0
          %580 = vmatpush1.msra.mxu0 0.0
          %581 = vmatprep.subr.mxu0 0.0
          %582 = vmatpush1.msra.mxu0 0.0
          %583 = vmatprep.subr.mxu0 0.0
          %584 = vmatpush1.msra.mxu0 0.0
          %585 = vmatprep.subr.mxu0 0.0
          %586 = vmatpush1.msra.mxu0 0.0
          %587 = vmatprep.subr.mxu0 0.0
          %588 = vmatpush1.msra.mxu0 0.0
          %589 = vmatprep.subr.mxu0 0.0
          %590 = vmatpush1.msra.mxu0 0.0
          %591 = vmatprep.subr.mxu0 0.0
          %592 = vmatpush1.msra.mxu0 0.0
          %593 = vmatprep.subr.mxu0 0.0
          %594 = vmatpush1.msra.mxu0 0.0
          %595 = vmatprep.subr.mxu0 0.0
          %596 = vmatpush1.msra.mxu0 0.0
          %597 = vmatprep.subr.mxu0 0.0
          %598 = vmatpush1.msra.mxu0 0.0
          %599 = vmatprep.subr.mxu0 0.0
          %600 = vmatpush1.msra.mxu0 0.0
          %601 = vmatprep.subr.mxu0 0.0
          %602 = vmatpush1.msra.mxu0 0.0
          %603 = vmatprep.subr.mxu0 0.0
          %604 = vmatpush1.msra.mxu0 0.0
          %605 = vmatprep.subr.mxu0 0.0
          %606 = vmatpush1.msra.mxu0 0.0
          %607 = vmatprep.subr.mxu0 0.0
          %608 = vmatpush1.msra.mxu0 0.0
          %609 = vmatprep.subr.mxu0 0.0
          %610 = vmatpush1.msra.mxu0 0.0
          %611 = vmatprep.mubr.f32.mxu0 0.0
          %612 = vmatmul.mubr.f32.gmra.mrb[0].mxu0 %v523
          %v613 = vpop.f32.mrb[0].mxu0
          %v614 = vadd.f32 %v545, %v613
          %v615 = vpop.f32.mrb[0].mxu0
          %616 = vdwg.mxu0
          %617 = vst [vmem:[%s240] sm:$0xff] %v614
        $region48: #{tpu_custom_call.1} parent=39 // pred_fallthru
          _
        %s618 = sand.u32 %s151, 1
        %s619 = scalar_lea.sflag [#allocation4], %s618
        %s620 = sand.u32 %s151, 1
        %s621 = smul.addr %s620, 8
        %s622 = scalar_lea.vmem [#allocation3], %s621
        // Predicated region
        $region49: #{tpu_custom_call.1} parent=39 // pred_check
          %p623 = pneg %p161
        $region50: #{tpu_custom_call.1} parent=39 // pred_check_branch
          %625 = sbr.rel (%p623) target = $region52
        $region51: #{tpu_custom_call.1} parent=39 // pred_region
          %s627 = ssub.s32 128, 128
          %628 = vsyncadd %s619, %s627
          %s629 = smul.addr %s23, 128
          %s630 = scalar_lea.hbm %s5, %s629
          %s632 = sshll.u32 %s622, 4
          %s633 = int_to_ptr.vmem [resolvable:$true] %s632
          %635 = dma.vmem_to_hbm [thread:$0]  %s633, 128, %s630, %s619
        $region52: #{tpu_custom_call.1} parent=39 // pred_fallthru
          _
      $region40: #{tpu_custom_call.1} parent=5 // pred_fallthru
        _
      %p636 = scmp.le.s32.totalorder 2, %s14
      // Predicated region
      $region53: #{tpu_custom_call.1} parent=5 // pred_check
        %p637 = pneg %p636
      $region54: #{tpu_custom_call.1} parent=5 // pred_check_branch
        %639 = sbr.rel (%p637) target = $region56
      $region55: #{tpu_custom_call.1} parent=5 // pred_region
        %s640 = ssub.s32 %s14, 2
        // Predicated region
        $region57: #{tpu_custom_call.1} parent=55 // pred_check
          %p641 = pneg %p167
        $region58: #{tpu_custom_call.1} parent=55 // pred_check_branch
          %643 = sbr.rel (%p641) target = $region60
        $region59: #{tpu_custom_call.1} parent=55 // pred_region
          %s644 = sand.u32 %s152, 1
          %s645 = scalar_lea.sflag [#allocation4], %s644
          %s646 = sand.u32 %s152, 1
          %s647 = smul.addr %s646, 8
          %s648 = scalar_lea.vmem [#allocation3], %s647
          %649 = dma.done %s645, 128
        $region60: #{tpu_custom_call.1} parent=55 // pred_fallthru
          _
      $region56: #{tpu_custom_call.1} parent=5 // pred_fallthru
        _
    $region6: #{tpu_custom_call.1} parent=1 // loop_footer
      %s18 = sadd.s32 1, %s14
    $region7: #{tpu_custom_call.1} parent=1 // loop_footer_branch
      %13 = sbr.rel target = $region3
    $region8: #{tpu_custom_call.1} parent=1 // loop_exit
      _
    %650 = vsyncpa [#allocation4], 1
    %s651 = scalar_lea.sflag [#allocation4], 1
    %652 = vsyncpa %s651, 1

</llo_original>
